<compile_context>
chip_gen: v7x
topology: tpu7x:2x2x1
jax: 0.10.0
libtpu: 0.0.40
codegen_flags: <defaults>
</compile_context>

<pallas_src>
import functools

import jax
import jax.numpy as jnp
from jax.experimental import pallas as pl
from jax.experimental.pallas import tpu as pltpu


def _round_up(x, m):
    return ((x + m - 1) // m) * m


def _fused_linear_relu_kernel(x_ref, w_ref, o_ref):
    # x_ref: (tm, K_aug)   w_ref: (K_aug, out_pad)   o_ref: (tm, out_pad)
    # Bias is folded into the last row of w (x carries a trailing ones
    # column), so the whole FeatPool forward is one MXU matmul + ReLU.
    y = jnp.dot(x_ref[...], w_ref[...], preferred_element_type=jnp.float32)
    o_ref[...] = jnp.maximum(y, 0.0).astype(o_ref.dtype)


def fuse_params(params, lane_pad=128, dtype=jnp.float32):
    """Build one block-diagonal weight with the bias folded into the last row.

    params: list of (W_i, b_i), W_i: (F_i, out_size), b_i: (out_size,)
            (W_i is the transposed PyTorch Linear weight).
    Returns (w_fused, out_total):
      w_fused: (sum(F_i) + 1, round_up(out_size * num_feats, lane_pad))
      out_total: out_size * num_feats (true output width before lane padding)
    """
    feat_dims = [w.shape[0] for w, _ in params]
    out_size = params[0][0].shape[1]
    k_total = sum(feat_dims)
    out_total = out_size * len(params)
    out_pad = _round_up(out_total, lane_pad)

    w_fused = jnp.zeros((k_total + 1, out_pad), dtype)
    row = 0
    for i, (w, b) in enumerate(params):
        col = i * out_size
        w_fused = w_fused.at[row:row + w.shape[0], col:col + out_size].set(
            w.astype(dtype))
        w_fused = w_fused.at[k_total, col:col + out_size].set(b.astype(dtype))
        row += w.shape[0]
    return w_fused, out_total


def _fused_call(x_aug, w_fused, out_dtype, tm):
    n_pad, k_aug = x_aug.shape
    _, out_pad = w_fused.shape
    return pl.pallas_call(
        _fused_linear_relu_kernel,
        out_shape=jax.ShapeDtypeStruct((n_pad, out_pad), out_dtype),
        grid=(n_pad // tm,),
        in_specs=[
            pl.BlockSpec((tm, k_aug), lambda i: (i, 0)),       # batch tile
            pl.BlockSpec((k_aug, out_pad), lambda i: (0, 0)),  # replicated W
        ],
        out_specs=pl.BlockSpec((tm, out_pad), lambda i: (i, 0)),
        compiler_params=pltpu.CompilerParams(
            # Batch axis is embarrassingly parallel -> megacore sharding on
            # v7x (2 TCs/chip); harmless on v5e/v6e.
            dimension_semantics=("parallel",),
        ),
    )(x_aug, w_fused)


def feat_pool_forward(feats, w_fused, *, out_total, dropout_rate=0.0,
                      training=False, compute_dtype=None, tm=256):
    """feats: list of (N, 1, F_i) arrays.  w_fused/out_total from fuse_params.

    Dropout is eval-mode identity.
    """
    feats = list(feats)
    if feats[0].shape[2] == 20:
        # Preserved from the PyTorch module; produces the same degenerate
        # shapes as the original (the Linear then sees a rank-reduced input).
        # TODO(synk): not exercised here; keep as plain-JAX glue.
        feats[0] = jnp.mean(feats[0], axis=2)

    xs = [jnp.squeeze(f, axis=1) for f in feats]
    n = xs[0].shape[0]
    out_dtype = xs[0].dtype

    # Concatenate all features once and append a ones column so the bias is
    # applied by the last row of the fused weight.
    x_cat = jnp.concatenate(xs + [jnp.ones((n, 1), xs[0].dtype)], axis=1)

    if compute_dtype is not None:
        # e.g. jnp.bfloat16 on v6e/v7x: full-rate MXU, half the DMA bytes;
        # accumulate + ReLU stay in f32 inside the kernel.
        x_cat = x_cat.astype(compute_dtype)
        w_fused = w_fused.astype(compute_dtype)

    # Pad batch to a sublane-friendly multiple; tile large batches so the
    # BlockSpec pipeline double-buffers and the grid can shard across cores.
    n_pad = _round_up(n, 8)
    if n_pad <= tm:
        tm_eff = n_pad
    else:
        tm_eff = tm
        n_pad = _round_up(n, tm)
    if n_pad != n:
        x_cat = jnp.pad(x_cat, ((0, n_pad - n), (0, 0)))

    out = _fused_call(x_cat, w_fused, out_dtype, tm_eff)

    # TODO(synk): training-mode dropout not implemented (eval-mode identity,
    # matching module.eval()); `training=True` behaves like eval.
    return out[:n, :out_total]


def init_params(key, feat_dims, out_size, dtype=jnp.float32):
    params = []
    for dim in feat_dims:
        key, kw, kb = jax.random.split(key, 3)
        bound = 1.0 / jnp.sqrt(dim)
        # (in, out) layout == transposed PyTorch Linear weight.
        w = jax.random.uniform(kw, (dim, out_size), dtype, -bound, bound)
        b = jax.random.uniform(kb, (out_size,), dtype, -bound, bound)
        params.append((w, b))
    return params


if __name__ == "__main__":
    key = jax.random.PRNGKey(0)

    N = 2
    feat_dims = [32, 48]
    out_size = 32
    dropout = 0.5  # eval-mode -> identity

    key, k0, k1, kp = jax.random.split(key, 4)
    feats = [
        jax.random.normal(k0, (N, 1, feat_dims[0]), jnp.float32),
        jax.random.normal(k1, (N, 1, feat_dims[1]), jnp.float32),
    ]
    params = init_params(kp, feat_dims, out_size)

    # Fuse all per-feature Linear layers into one block-diagonal weight once.
    w_fused, out_total = fuse_params(params)

    fwd = jax.jit(functools.partial(
        feat_pool_forward, out_total=out_total,
        dropout_rate=dropout, training=False))
    out = fwd(feats, w_fused)
    out = jax.block_until_ready(out)
    assert out.shape == (N, out_size * len(feat_dims)), out.shape

    # Cross-check against plain-JAX reference.
    ref = jnp.concatenate(
        [
            jnp.maximum(jnp.squeeze(feats[i], 1) @ w + b, 0.0)
            for i, (w, b) in enumerate(params)
        ],
        axis=1,
    )
    assert jnp.allclose(out, ref, atol=1e-5, rtol=1e-5)

    print("KERNEL_OK")
</pallas_src>

<mosaic_0001>
module attributes {stable_mosaic.version = 11 : i64} {
  func.func @_fused_linear_relu_kernel(%arg0: i32, %arg1: memref<8x81xf32, #tpu.memory_space<vmem>>, %arg2: memref<81x128xf32, #tpu.memory_space<vmem>>, %arg3: memref<8x128xf32, #tpu.memory_space<vmem>>) attributes {dimension_semantics = [#tpu.dimension_semantics<parallel>], iteration_bounds = array<i64: 1>, scalar_prefetch = 0 : i64, scratch_operands = 0 : i64, tpu.core_type = #tpu.core_type<tc>, window_params = [{transform_indices = @transform_0, window_bounds = array<i64: 8, 81>}, {pipeline_mode = #tpu.pipeline_mode<synchronous>, transform_indices = @transform_1, window_bounds = array<i64: 81, 128>}, {transform_indices = @transform_2, window_bounds = array<i64: 8, 128>}]} {
    %c0 = arith.constant 0 : index
    %c0_0 = arith.constant 0 : index
    %0 = vector.load %arg1[%c0, %c0_0] : memref<8x81xf32, #tpu.memory_space<vmem>>, vector<8x81xf32>
    %c0_1 = arith.constant 0 : index
    %c0_2 = arith.constant 0 : index
    %1 = vector.load %arg2[%c0_1, %c0_2] : memref<81x128xf32, #tpu.memory_space<vmem>>, vector<81x128xf32>
    %cst = arith.constant dense<0.000000e+00> : vector<8x128xf32>
    %2 = tpu.matmul %0, %1, %cst {dimension_numbers = #tpu.dot_dimension_numbers<[1], [0], [0], [1], [0, 0, 1, 1], [], []>} : vector<8x81xf32>, vector<81x128xf32>, vector<8x128xf32> -> vector<8x128xf32>
    %cst_3 = arith.constant 0.000000e+00 : f32
    %3 = vector.broadcast %cst_3 : f32 to vector<8x128xf32>
    %4 = arith.maximumf %2, %3 : vector<8x128xf32>
    %c0_4 = arith.constant 0 : index
    %c0_5 = arith.constant 0 : index
    %5 = vector.load %arg3[%c0_4, %c0_5] : memref<8x128xf32, #tpu.memory_space<vmem>>, vector<8x128xf32>
    tpu.vector_store %arg3[%c0_4, %c0_5], %4 {strides = array<i32>} : memref<8x128xf32, #tpu.memory_space<vmem>>, vector<8x128xf32>,
    return
  }
  func.func @transform_0(%arg0: i32) -> (i32, i32) {
    %c0_i32 = arith.constant 0 : i32
    %c0_i32_0 = arith.constant 0 : i32
    return %arg0, %c0_i32 : i32, i32
  }
  func.func @transform_1(%arg0: i32) -> (i32, i32) {
    %c0_i32 = arith.constant 0 : i32
    %c0_i32_0 = arith.constant 0 : i32
    %c0_i32_1 = arith.constant 0 : i32
    return %c0_i32, %c0_i32_0 : i32, i32
  }
  func.func @transform_2(%arg0: i32) -> (i32, i32) {
    %c0_i32 = arith.constant 0 : i32
    %c0_i32_0 = arith.constant 0 : i32
    return %arg0, %c0_i32 : i32, i32
  }
}

</mosaic_0001>

<llo_original>
// kernel: feat_pool_forward.1
$region0: #{feat_pool_forward.1}
  #allocation0 [shape = 'u32[]', space=smem, size = 0x4, offset = 0x4, fixed_abs, tag = 'smem constant byte address 0x4 - core index']
  #allocation1 [shape = 'u32[144,128]{1,0:T(1,128)}', space=vmem, size = 0x12000, scoped, tag = 'internal scratch']
  %s0 = inlined_call_operand.vmem [shape: f32[8,81], index: 0, kind: input, shape index: {}]
  %s1 = inlined_call_operand.hbm [shape: f32[81,128], index: 1, kind: input, shape index: {}]
  %s2 = inlined_call_operand.vmem [shape: f32[8,128], index: 2, kind: output, shape index: {}]
  %s3 = sld [smem:[#allocation0]]
  $region22: #{feat_pool_forward.1} parent=0
    _
  %s5 = ssub.s32 1, %s3
  %s6 = scalar_select 0, %s5, %s3
  $region1: #{feat_pool_forward.1} parent=0
    #allocation2 [shape = 'u8[45056]{0}', space=vmem, size = 0xb000, scoped, tag = 'input window, operand 1, single buffered']
    #allocation3 [shape = 's32[1]{0}', space=sflag, size = 0x4, scoped, tag = 'scoped memory for feat_pool_forward.1']
    %7 = vsyncpa [#allocation3], 0
    // Predicated region
    $region2: #{feat_pool_forward.1} parent=1 // pred_check
      _
    $region3: #{feat_pool_forward.1} parent=1 // pred_check_branch
      %9 = sbr.rel (0) target = $region5
    $region4: #{feat_pool_forward.1} parent=1 // pred_region
      _
    $region5: #{feat_pool_forward.1} parent=1 // pred_fallthru
      _
    // Predicated region
    $region6: #{feat_pool_forward.1} parent=1 // pred_check
      _
    $region7: #{feat_pool_forward.1} parent=1 // pred_check_branch
      %11 = sbr.rel (0) target = $region9
    $region8: #{feat_pool_forward.1} parent=1 // pred_region
      %s13 = ssub.s32 1408, 1408
      %14 = vsyncadd [#allocation3], %s13
      %s15 = sshll.u32 [#allocation2], 4
      %s16 = int_to_ptr.vmem [resolvable:$true] %s15
      %21 = dma.hbm_to_vmem [thread:$0]  %s1, 1408, %s16, [#allocation3], 128, 128, 8
    $region9: #{feat_pool_forward.1} parent=1 // pred_fallthru
      _
    // Predicated region
    $region10: #{feat_pool_forward.1} parent=1 // pred_check
      _
    $region11: #{feat_pool_forward.1} parent=1 // pred_check_branch
      %23 = sbr.rel (0) target = $region13
    $region12: #{feat_pool_forward.1} parent=1 // pred_region
      %24 = dma.done [#allocation3], 1408
    $region13: #{feat_pool_forward.1} parent=1 // pred_fallthru
      _
    %v25 = vld [vmem:[%s0] sm:$0xff]
    %v26 = vld [vmem:[#allocation2] sm:$0xff]
    %v27 = vld [vmem:[#allocation2 + $0x8] sm:$0xff]
    %v28 = vld [vmem:[#allocation2 + $0x10] sm:$0xff]
    %v29 = vld [vmem:[#allocation2 + $0x18] sm:$0xff]
    %v30 = vld [vmem:[#allocation2 + $0x20] sm:$0xff]
    %v31 = vld [vmem:[#allocation2 + $0x28] sm:$0xff]
    %v32 = vld [vmem:[#allocation2 + $0x30] sm:$0xff]
    %v33 = vld [vmem:[#allocation2 + $0x38] sm:$0xff]
    %v34 = vld [vmem:[#allocation2 + $0x40] sm:$0xff]
    %v35 = vld [vmem:[#allocation2 + $0x48] sm:$0xff]
    %v36 = vld [vmem:[#allocation2 + $0x50] sm:$0x1]
    %vm37 = vcmask 662528
    %v39 = vsel %vm37, %v25, 0
    %vm41 = vcmask 1040384
    %v43 = vsel %vm41, %v36, 0
    %45 = vmatprep.subr.mxu0 0.0
    %46 = vmatpush1.msra.mxu0 %v26
    %47 = vmatprep.subr.mxu0 0.0
    %48 = vmatpush1.msra.mxu0 %v27
    %49 = vmatprep.subr.mxu0 0.0
    %50 = vmatpush1.msra.mxu0 %v28
    %51 = vmatprep.subr.mxu0 0.0
    %52 = vmatpush1.msra.mxu0 %v29
    %53 = vmatprep.subr.mxu0 0.0
    %54 = vmatpush1.msra.mxu0 %v30
    %55 = vmatprep.subr.mxu0 0.0
    %56 = vmatpush1.msra.mxu0 %v31
    %57 = vmatprep.subr.mxu0 0.0
    %58 = vmatpush1.msra.mxu0 %v32
    %59 = vmatprep.subr.mxu0 0.0
    %60 = vmatpush1.msra.mxu0 %v33
    %61 = vmatprep.subr.mxu0 0.0
    %62 = vmatpush1.msra.mxu0 %v34
    %63 = vmatprep.subr.mxu0 0.0
    %64 = vmatpush1.msra.mxu0 %v35
    %65 = vmatprep.subr.mxu0 0.0
    %66 = vmatpush1.msra.mxu0 %v43
    %67 = vmatprep.subr.mxu0 0.0
    %68 = vmatpush1.msra.mxu0 0.0
    %69 = vmatprep.subr.mxu0 0.0
    %70 = vmatpush1.msra.mxu0 0.0
    %71 = vmatprep.subr.mxu0 0.0
    %72 = vmatpush1.msra.mxu0 0.0
    %73 = vmatprep.subr.mxu0 0.0
    %74 = vmatpush1.msra.mxu0 0.0
    %75 = vmatprep.subr.mxu0 0.0
    %76 = vmatpush1.msra.mxu0 0.0
    %77 = vmatprep.subr.mxu0 0.0
    %78 = vmatpush1.msra.mxu0 0.0
    %79 = vmatprep.subr.mxu0 0.0
    %80 = vmatpush1.msra.mxu0 0.0
    %81 = vmatprep.subr.mxu0 0.0
    %82 = vmatpush1.msra.mxu0 0.0
    %83 = vmatprep.subr.mxu0 0.0
    %84 = vmatpush1.msra.mxu0 0.0
    %85 = vmatprep.subr.mxu0 0.0
    %86 = vmatpush1.msra.mxu0 0.0
    %87 = vmatprep.subr.mxu0 0.0
    %88 = vmatpush1.msra.mxu0 0.0
    %89 = vmatprep.subr.mxu0 0.0
    %90 = vmatpush1.msra.mxu0 0.0
    %91 = vmatprep.subr.mxu0 0.0
    %92 = vmatpush1.msra.mxu0 0.0
    %93 = vmatprep.subr.mxu0 0.0
    %94 = vmatpush1.msra.mxu0 0.0
    %95 = vmatprep.subr.mxu0 0.0
    %96 = vmatpush1.msra.mxu0 0.0
    %97 = vmatprep.subr.mxu0 0.0
    %98 = vmatpush1.msra.mxu0 0.0
    %99 = vmatprep.subr.mxu0 0.0
    %100 = vmatpush1.msra.mxu0 0.0
    %101 = vmatprep.subr.mxu0 0.0
    %102 = vmatpush1.msra.mxu0 0.0
    %103 = vmatprep.subr.mxu0 0.0
    %104 = vmatpush1.msra.mxu0 0.0
    %105 = vmatprep.subr.mxu0 0.0
    %106 = vmatpush1.msra.mxu0 0.0
    %107 = vmatprep.subr.mxu0 0.0
    %108 = vmatpush1.msra.mxu0 0.0
    %109 = vmatprep.mubr.f32.mxu0 0.0
    %110 = vmatmul.mubr.f32.gmra.mrb[0].mxu0 %v39
    %v111 = vpop.f32.mrb[0].mxu0
    %v112 = vadd.f32 0.0, %v111
    %v113 = vpop.f32.mrb[0].mxu0
    %114 = vdwg.mxu0
    %v115 = vmax.f32 %v112, 0.0
    %116 = vst [vmem:[%s2] sm:$0xff] %v115
    // Predicated region
    $region14: #{feat_pool_forward.1} parent=1 // pred_check
      _
    $region15: #{feat_pool_forward.1} parent=1 // pred_check_branch
      %118 = sbr.rel (0) target = $region17
    $region16: #{feat_pool_forward.1} parent=1 // pred_region
      _
    $region17: #{feat_pool_forward.1} parent=1 // pred_fallthru
      _
    // Predicated region
    $region18: #{feat_pool_forward.1} parent=1 // pred_check
      _
    $region19: #{feat_pool_forward.1} parent=1 // pred_check_branch
      %120 = sbr.rel (0) target = $region21
    $region20: #{feat_pool_forward.1} parent=1 // pred_region
      _
    $region21: #{feat_pool_forward.1} parent=1 // pred_fallthru
      _
    %121 = vsyncpa [#allocation3], 1

</llo_original>
